<compile_context>
chip_gen: v6e
topology: v6e:2x2x1
jax: 0.10.0
libtpu: 0.0.40
codegen_flags: <defaults>
</compile_context>

<pallas_src>
import jax
import jax.numpy as jnp
from jax.experimental import pallas as pl
from jax.experimental.pallas import tpu as pltpu


def _make_kernel(apply_sigmoid: bool):
    def kernel(x_ref, w_ref, b_ref, o_ref):
        # x_ref: (TB, F) f32   -- pipelined batch tile
        # w_ref: (1, F)  f32   -- resident weight row (torch (out_features, in_features))
        # b_ref: (1, 1)  f32   -- scalar bias in SMEM
        # o_ref: (1, TB) f32   -- lane-dense output (batch on the lane axis)
        y = jax.lax.dot_general(
            w_ref[...], x_ref[...],
            dimension_numbers=(((1,), (1,)), ((), ())),   # w @ x^T -> (1, TB) on the MXU
            preferred_element_type=jnp.float32,
        )
        y = y + b_ref[0, 0]
        if apply_sigmoid:
            y = jax.nn.sigmoid(y)
        o_ref[...] = y.astype(o_ref.dtype)
    return kernel


def _round_up(n: int, m: int) -> int:
    return ((n + m - 1) // m) * m


def _choose_batch_tile(batch_p8: int, num_features: int, itemsize: int = 4) -> int:
    """Pick the batch tile TB.

    TB is either the full (8-padded) batch (single tile; block == full dim is always
    layout-legal) or a multiple of 128 (keeps the lane-dense output block aligned),
    sized so the double-buffered x tile stays well inside the scoped-VMEM default on
    all generations (v5e 16 MiB, v6e/v7x 32 MiB scoped; v7x has only 64 MiB physical).
    """
    budget = 6 * 1024 * 1024                       # bytes allowed for x's double buffer
    max_rows = budget // (2 * num_features * itemsize)
    if batch_p8 <= max(max_rows, 128):
        return batch_p8                            # single tile
    tb = min(512, (max_rows // 128) * 128)
    # TODO(synk): if num_features is so large that even a 128-row tile overflows VMEM,
    # add a trailing K ("arbitrary") grid axis with an f32 accumulator in scratch.
    return max(tb, 128)


def review_classifier_forward(x, w, b, apply_sigmoid: bool = False):
    """Forward pass of ReviewClassifier.

    x: (B, F) float32
    w: (1, F) float32   -- torch nn.Linear weight layout (out_features, in_features)
    b: (1,)  float32    -- torch nn.Linear bias
    returns: (B,) float32 logits (probabilities if apply_sigmoid=True)
    """
    B, F = x.shape
    assert w.shape == (1, F) and b.shape == (1,)

    batch_p8 = _round_up(B, 8)
    TB = _choose_batch_tile(batch_p8, F, jnp.dtype(x.dtype).itemsize)
    B_padded = _round_up(B, TB)
    if B_padded != B:
        x = jnp.pad(x, ((0, B_padded - B), (0, 0)))   # zero rows; sliced off below
    num_tiles = B_padded // TB

    out = pl.pallas_call(
        _make_kernel(apply_sigmoid),
        out_shape=jax.ShapeDtypeStruct((1, B_padded), x.dtype),
        grid=(num_tiles,),
        in_specs=[
            pl.BlockSpec((TB, F), lambda i: (i, 0)),               # pipelined x tiles
            pl.BlockSpec((1, F), lambda i: (0, 0)),                # weight stays resident
            pl.BlockSpec(memory_space=pltpu.MemorySpace.SMEM),     # scalar bias in SMEM
        ],
        out_specs=pl.BlockSpec((1, TB), lambda i: (0, i)),         # lane-dense output row
        compiler_params=pltpu.CompilerParams(
            dimension_semantics=("parallel",),                     # megacore on v7x
        ),
    )(x, w, b.reshape(1, 1))

    # torch's .squeeze(): (B, 1) -> (B,)  (pure slice/reshape, stays in plain JAX)
    return out[0, :B]


def reference_forward(x, w, b, apply_sigmoid: bool = False):
    y = (x @ w.T).squeeze(-1) + b[0]
    if apply_sigmoid:
        y = jax.nn.sigmoid(y)
    return y


if __name__ == "__main__":
    batch = 2
    num_features = 32

    key = jax.random.PRNGKey(0)
    kx, kw, kb = jax.random.split(key, 3)

    # Deterministic synthetic inputs/params (shapes match nn.Linear(num_features, 1)).
    x = jax.random.normal(kx, (batch, num_features), dtype=jnp.float32)
    w = jax.random.normal(kw, (1, num_features), dtype=jnp.float32) * 0.1   # (out, in)
    b = jax.random.normal(kb, (1,), dtype=jnp.float32) * 0.1

    # Logits path (apply_sigmoid=False), as used with BCEWithLogits loss.
    y_logits = jax.block_until_ready(review_classifier_forward(x, w, b, apply_sigmoid=False))
    # Probability path (apply_sigmoid=True).
    y_probs = jax.block_until_ready(review_classifier_forward(x, w, b, apply_sigmoid=True))

    ref_logits = reference_forward(x, w, b, apply_sigmoid=False)
    ref_probs = reference_forward(x, w, b, apply_sigmoid=True)

    assert y_logits.shape == (batch,)
    assert y_probs.shape == (batch,)
    assert jnp.allclose(y_logits, ref_logits, atol=1e-5, rtol=1e-5)
    assert jnp.allclose(y_probs, ref_probs, atol=1e-5, rtol=1e-5)

    print("KERNEL_OK")
</pallas_src>

<mosaic_0001>
module attributes {stable_mosaic.version = 11 : i64} {
  func.func @kernel(%arg0: i32, %arg1: memref<8x32xf32, #tpu.memory_space<vmem>>, %arg2: memref<1x32xf32, #tpu.memory_space<vmem>>, %arg3: memref<1x1xf32, #tpu.memory_space<smem>>, %arg4: memref<1x8xf32, #tpu.memory_space<vmem>>) attributes {dimension_semantics = [#tpu.dimension_semantics<parallel>], iteration_bounds = array<i64: 1>, scalar_prefetch = 0 : i64, scratch_operands = 0 : i64, tpu.core_type = #tpu.core_type<tc>, window_params = [{transform_indices = @transform_0, window_bounds = array<i64: 8, 32>}, {pipeline_mode = #tpu.pipeline_mode<synchronous>, transform_indices = @transform_1, window_bounds = array<i64: 1, 32>}, {transform_indices = @transform_2, window_bounds = array<i64: 1, 1>}, {transform_indices = @transform_3, window_bounds = array<i64: 1, 8>}]} {
    %c0 = arith.constant 0 : index
    %c0_0 = arith.constant 0 : index
    %0 = vector.load %arg2[%c0, %c0_0] : memref<1x32xf32, #tpu.memory_space<vmem>>, vector<1x32xf32>
    %c0_1 = arith.constant 0 : index
    %c0_2 = arith.constant 0 : index
    %1 = vector.load %arg1[%c0_1, %c0_2] : memref<8x32xf32, #tpu.memory_space<vmem>>, vector<8x32xf32>
    %cst = arith.constant dense<0.000000e+00> : vector<1x8xf32>
    %2 = tpu.matmul %0, %1, %cst {dimension_numbers = #tpu.dot_dimension_numbers<[1], [1], [0], [0], [0, 0, 1, 0], [], []>} : vector<1x32xf32>, vector<8x32xf32>, vector<1x8xf32> -> vector<1x8xf32>
    %c0_3 = arith.constant 0 : index
    %c0_4 = arith.constant 0 : index
    %3 = memref.load %arg3[%c0_3, %c0_4] : memref<1x1xf32, #tpu.memory_space<smem>>
    %4 = vector.broadcast %3 : f32 to vector<1x8xf32>
    %5 = arith.addf %2, %4 : vector<1x8xf32>
    %c0_5 = arith.constant 0 : index
    %c0_6 = arith.constant 0 : index
    %6 = vector.load %arg4[%c0_5, %c0_6] : memref<1x8xf32, #tpu.memory_space<vmem>>, vector<1x8xf32>
    tpu.vector_store %arg4[%c0_5, %c0_6], %5 {strides = array<i32>} : memref<1x8xf32, #tpu.memory_space<vmem>>, vector<1x8xf32>,
    return
  }
  func.func @transform_0(%arg0: i32) -> (i32, i32) {
    %c0_i32 = arith.constant 0 : i32
    %c0_i32_0 = arith.constant 0 : i32
    return %arg0, %c0_i32 : i32, i32
  }
  func.func @transform_1(%arg0: i32) -> (i32, i32) {
    %c0_i32 = arith.constant 0 : i32
    %c0_i32_0 = arith.constant 0 : i32
    %c0_i32_1 = arith.constant 0 : i32
    return %c0_i32, %c0_i32_0 : i32, i32
  }
  func.func @transform_2(%arg0: i32) -> (i32, i32) {
    %c0_i32 = arith.constant 0 : i32
    %c0_i32_0 = arith.constant 0 : i32
    %c0_i32_1 = arith.constant 0 : i32
    return %c0_i32, %c0_i32_0 : i32, i32
  }
  func.func @transform_3(%arg0: i32) -> (i32, i32) {
    %c0_i32 = arith.constant 0 : i32
    %c0_i32_0 = arith.constant 0 : i32
    return %c0_i32, %arg0 : i32, i32
  }
}

</mosaic_0001>

<llo_original>
// kernel: tpu_custom_call.1
$region0: #{tpu_custom_call.1}
  #allocation0 [shape = 'u32[]', space=smem, size = 0x4, offset = 0x4, fixed_abs, tag = 'smem constant byte address 0x4 - core index']
  #allocation1 [shape = 'u32[144,128]{1,0:T(1,128)}', space=vmem, size = 0x12000, scoped, tag = 'internal scratch']
  #allocation2 [shape = 'f32[1,1]{1,0:T(1,128)S(6)}', space=smem, size = 0x200, scoped, tag = 'scoped memory for tpu_custom_call.1']
  %s0 = inlined_call_operand.hbm [shape: f32[8,32], index: 0, kind: input, shape index: {}]
  %s1 = inlined_call_operand.vmem [shape: f32[1,32], index: 1, kind: input, shape index: {}]
  %s2 = inlined_call_operand.<no memory space> [shape: f32[1,1], index: 2, kind: input, shape index: {}]
  %s3 = inlined_call_operand.hbm [shape: f32[1,8], index: 3, kind: output, shape index: {}]
  %s4 = sld [smem:[#allocation0]]
  $region26: #{tpu_custom_call.1} parent=0
    _
  %s6 = ssub.s32 1, %s4
  %s7 = scalar_select 0, %s6, %s4
  %8 = sst [smem:[#allocation2]] %s2
  $region1: #{tpu_custom_call.1} parent=0
    #allocation3 [shape = 'u8[4096]{0}', space=vmem, size = 0x1000, scoped, tag = 'input window, operand 0, single buffered']
    #allocation4 [shape = 's32[1]{0}', space=sflag, size = 0x4, scoped, tag = 'scoped memory for tpu_custom_call.1']
    #allocation5 [shape = 's32[1]{0}', space=sflag, size = 0x4, scoped, tag = 'scoped memory for tpu_custom_call.1']
    #allocation6 [shape = 'u8[512]{0}', space=vmem, size = 0x400, scoped, tag = 'output window, operand 0, single buffered']
    %9 = vsyncpa [#allocation4], 0
    %10 = vsyncpa [#allocation5], 0
    // Predicated region
    $region2: #{tpu_custom_call.1} parent=1 // pred_check
      _
    $region3: #{tpu_custom_call.1} parent=1 // pred_check_branch
      %12 = sbr.rel (0) target = $region5
    $region4: #{tpu_custom_call.1} parent=1 // pred_region
      %s14 = ssub.s32 128, 128
      %15 = vsyncadd [#allocation4], %s14
      %s17 = sshll.u32 [#allocation3], 4
      %s18 = int_to_ptr.vmem [resolvable:$true] %s17
      %20 = dma.hbm_to_vmem [thread:$0]  %s0, 128, %s18, [#allocation4]
    $region5: #{tpu_custom_call.1} parent=1 // pred_fallthru
      _
    // Predicated region
    $region6: #{tpu_custom_call.1} parent=1 // pred_check
      _
    $region7: #{tpu_custom_call.1} parent=1 // pred_check_branch
      %22 = sbr.rel (0) target = $region9
    $region8: #{tpu_custom_call.1} parent=1 // pred_region
      _
    $region9: #{tpu_custom_call.1} parent=1 // pred_fallthru
      _
    // Predicated region
    $region10: #{tpu_custom_call.1} parent=1 // pred_check
      _
    $region11: #{tpu_custom_call.1} parent=1 // pred_check_branch
      %24 = sbr.rel (0) target = $region13
    $region12: #{tpu_custom_call.1} parent=1 // pred_region
      _
    $region13: #{tpu_custom_call.1} parent=1 // pred_fallthru
      _
    // Predicated region
    $region14: #{tpu_custom_call.1} parent=1 // pred_check
      _
    $region15: #{tpu_custom_call.1} parent=1 // pred_check_branch
      %26 = sbr.rel (0) target = $region17
    $region16: #{tpu_custom_call.1} parent=1 // pred_region
      %27 = dma.done [#allocation4], 128
    $region17: #{tpu_custom_call.1} parent=1 // pred_fallthru
      _
    %v28 = vld [vmem:[%s1] sm:$0x1]
    %v29 = vld [vmem:[#allocation3] sm:$0xff]
    %s30 = sld [smem:[#allocation2]]
    %v31 = vstv %s30
    %vm32 = vcmask 261120
    %v34 = vsel %vm32, %v28, 0
    %v37 = vsel %vm32, %v29, 0
    %39 = vmatprep.subr.mxu0 0.0
    %40 = vmatpush1.xpose.msra.mxu0 0.0
    %41 = vmatprep.subr.mxu0 0.0
    %42 = vmatpush1.xpose.msra.mxu0 0.0
    %43 = vmatprep.subr.mxu0 0.0
    %44 = vmatpush1.xpose.msra.mxu0 0.0
    %45 = vmatprep.subr.mxu0 0.0
    %46 = vmatpush1.xpose.msra.mxu0 0.0
    %47 = vmatprep.subr.mxu0 0.0
    %48 = vmatpush1.xpose.msra.mxu0 0.0
    %49 = vmatprep.subr.mxu0 0.0
    %50 = vmatpush1.xpose.msra.mxu0 0.0
    %51 = vmatprep.subr.mxu0 0.0
    %52 = vmatpush1.xpose.msra.mxu0 0.0
    %53 = vmatprep.subr.mxu0 0.0
    %54 = vmatpush1.xpose.msra.mxu0 0.0
    %55 = vmatprep.subr.mxu0 0.0
    %56 = vmatpush1.xpose.msra.mxu0 0.0
    %57 = vmatprep.subr.mxu0 0.0
    %58 = vmatpush1.xpose.msra.mxu0 0.0
    %59 = vmatprep.subr.mxu0 0.0
    %60 = vmatpush1.xpose.msra.mxu0 0.0
    %61 = vmatprep.subr.mxu0 0.0
    %62 = vmatpush1.xpose.msra.mxu0 0.0
    %63 = vmatprep.subr.mxu0 0.0
    %64 = vmatpush1.xpose.msra.mxu0 0.0
    %65 = vmatprep.subr.mxu0 0.0
    %66 = vmatpush1.xpose.msra.mxu0 0.0
    %67 = vmatprep.subr.mxu0 0.0
    %68 = vmatpush1.xpose.msra.mxu0 0.0
    %69 = vmatprep.subr.mxu0 0.0
    %70 = vmatpush1.xpose.msra.mxu0 %v37
    %71 = vmatprep.subr.mxu0 0.0
    %72 = vmatpush2.xpose.msra.mxu0 0.0
    %73 = vmatprep.subr.mxu0 0.0
    %74 = vmatpush2.xpose.msra.mxu0 0.0
    %75 = vmatprep.subr.mxu0 0.0
    %76 = vmatpush2.xpose.msra.mxu0 0.0
    %77 = vmatprep.subr.mxu0 0.0
    %78 = vmatpush2.xpose.msra.mxu0 0.0
    %79 = vmatprep.subr.mxu0 0.0
    %80 = vmatpush2.xpose.msra.mxu0 0.0
    %81 = vmatprep.subr.mxu0 0.0
    %82 = vmatpush2.xpose.msra.mxu0 0.0
    %83 = vmatprep.subr.mxu0 0.0
    %84 = vmatpush2.xpose.msra.mxu0 0.0
    %85 = vmatprep.subr.mxu0 0.0
    %86 = vmatpush2.xpose.msra.mxu0 0.0
    %87 = vmatprep.subr.mxu0 0.0
    %88 = vmatpush2.xpose.msra.mxu0 0.0
    %89 = vmatprep.subr.mxu0 0.0
    %90 = vmatpush2.xpose.msra.mxu0 0.0
    %91 = vmatprep.subr.mxu0 0.0
    %92 = vmatpush2.xpose.msra.mxu0 0.0
    %93 = vmatprep.subr.mxu0 0.0
    %94 = vmatpush2.xpose.msra.mxu0 0.0
    %95 = vmatprep.subr.mxu0 0.0
    %96 = vmatpush2.xpose.msra.mxu0 0.0
    %97 = vmatprep.subr.mxu0 0.0
    %98 = vmatpush2.xpose.msra.mxu0 0.0
    %99 = vmatprep.subr.mxu0 0.0
    %100 = vmatpush2.xpose.msra.mxu0 0.0
    %101 = vmatprep.subr.mxu0 0.0
    %102 = vmatpush2.xpose.msra.mxu0 0.0
    %103 = vmatprep.mubr.f32.mxu0 0.0
    %104 = vmatmul.mubr.f32.gmra.mxu0 %v34
    %v105 = vpop.f32.mrf.mxu0
    %v106 = vadd.f32 %v31, %v105
    %v107 = vpop.f32.mrf.mxu0
    %108 = vdwg.mxu0
    %vm109 = vcmask 57344
    %110 = vst.msk [vmem:[#allocation6] sm:$0x1] %vm109, %v106
    // Predicated region
    $region18: #{tpu_custom_call.1} parent=1 // pred_check
      _
    $region19: #{tpu_custom_call.1} parent=1 // pred_check_branch
      %112 = sbr.rel (0) target = $region21
    $region20: #{tpu_custom_call.1} parent=1 // pred_region
      %s114 = ssub.s32 16, 16
      %115 = vsyncadd [#allocation5], %s114
      %s117 = sshll.u32 [#allocation6], 4
      %s118 = int_to_ptr.vmem [resolvable:$true] %s117
      %120 = dma.vmem_to_hbm [thread:$0]  %s118, 16, %s3, [#allocation5]
    $region21: #{tpu_custom_call.1} parent=1 // pred_fallthru
      _
    // Predicated region
    $region22: #{tpu_custom_call.1} parent=1 // pred_check
      _
    $region23: #{tpu_custom_call.1} parent=1 // pred_check_branch
      %122 = sbr.rel (0) target = $region25
    $region24: #{tpu_custom_call.1} parent=1 // pred_region
      %123 = dma.done [#allocation5], 16
    $region25: #{tpu_custom_call.1} parent=1 // pred_fallthru
      _
    %124 = vsyncpa [#allocation4], 1
    %125 = vsyncpa [#allocation5], 1

</llo_original>
